<compile_context>
chip_gen: v7x
topology: tpu7x:2x2x1
jax: 0.10.0
libtpu: 0.0.40
codegen_flags: <defaults>
</compile_context>

<pallas_src>
import functools

import jax
import jax.numpy as jnp
from jax import lax
from jax.experimental import pallas as pl
from jax.experimental.pallas import tpu as pltpu


def _odeg_euler_kernel(dt, num_steps, fuse_relu,
                       x_ref, x0_ref, adj_ref, mix_ref, out_ref):
    """Single invocation: all batches / nodes at once.

    x_ref / x0_ref / out_ref : (B*N, T*F)   lane-dense row slab
    adj_ref : (B*N, B*N)  block-diagonal adjacency, rows pre-scaled by 0.5*sigmoid(alpha)
    mix_ref : (T*F, T*F)  kron(I_T, W) + kron(W2, I_F) - 3*I   (feature+temporal mix, -3x)
    """
    x0 = x0_ref[...]
    adj = adj_ref[...]
    mix = mix_ref[...]

    def euler_step(_, xk):
        # graph diffusion (node contraction) on the MXU; alpha already folded in
        xa = jnp.dot(adj, xk, preferred_element_type=jnp.float32)       # (BN, TF)
        # feature mix + temporal mix + (-3x) fused into one MXU matmul
        xm = jnp.dot(xk, mix, preferred_element_type=jnp.float32)       # (BN, TF)
        return xk + dt * (xa + xm + x0)

    z = lax.fori_loop(0, num_steps, euler_step, x_ref[...], unroll=True)
    if fuse_relu:                       # ODEG.forward applies F.relu to the ODE output
        z = jnp.maximum(z, 0.0)
    out_ref[...] = z


def odeg_forward(x, x0, adj, alpha, w, d, w2, d2,
                 time=6.0, num_steps=1, fuse_relu=True):
    """ODEG.forward: odefunc.x0 = x0, explicit-Euler ODE solve on [0, time], then ReLU."""
    B, N, T, F = x.shape
    TF = T * F
    BN = B * N
    dt = float(time) / float(num_steps)
    f32 = jnp.float32

    # ---- parameter-only prep (glue, once per call; independent of x) ----
    adj_scaled = (0.5 * jax.nn.sigmoid(alpha.astype(f32)))[:, None] * adj.astype(f32)   # (N, N)
    adj_block = jnp.kron(jnp.eye(B, dtype=f32), adj_scaled)                              # (BN, BN)
    W = (w.astype(f32) * jnp.clip(d.astype(f32), 0.0, 1.0)) @ w.astype(f32).T            # (F, F)
    W2 = (w2.astype(f32) * jnp.clip(d2.astype(f32), 0.0, 1.0)) @ w2.astype(f32).T        # (T, T)
    mix = (jnp.kron(jnp.eye(T, dtype=f32), W)
           + jnp.kron(W2, jnp.eye(F, dtype=f32))
           - 3.0 * jnp.eye(TF, dtype=f32))                                               # (TF, TF)

    # ---- layout prep: flatten everything into one lane-dense (BN, TF) slab ----
    x2d = x.reshape(BN, TF).astype(f32)
    x02d = x0.reshape(BN, TF).astype(f32)

    kernel = functools.partial(_odeg_euler_kernel, dt, num_steps, fuse_relu)
    vmem = pl.BlockSpec(memory_space=pltpu.MemorySpace.VMEM)   # whole-array, VMEM resident

    out2d = pl.pallas_call(
        kernel,
        out_shape=jax.ShapeDtypeStruct((BN, TF), f32),
        in_specs=[vmem, vmem, vmem, vmem],
        out_specs=vmem,
    )(x2d, x02d, adj_block, mix)

    return out2d.reshape(B, N, T, F)


def odeg_reference(x, x0, adj, alpha, w, d, w2, d2,
                   time=6.0, num_steps=1, fuse_relu=True):
    """Pure-JAX reference mirroring the PyTorch ODEFunc + Euler solve + ODEG ReLU."""
    dt = float(time) / float(num_steps)

    def f(xk):
        sig = jax.nn.sigmoid(alpha)[None, :, None, None]
        xa = jnp.einsum('ij,bjtf->bitf', adj, xk)
        W = (w * jnp.clip(d, 0.0, 1.0)) @ w.T
        xw = jnp.einsum('bntf,fg->bntg', xk, W)
        W2 = (w2 * jnp.clip(d2, 0.0, 1.0)) @ w2.T
        xw2 = jnp.einsum('bntf,tm->bnmf', xk, W2)
        return sig / 2 * xa - 3.0 * xk + xw + xw2 + x0

    z = x
    for _ in range(num_steps):
        z = z + dt * f(z)
    if fuse_relu:
        z = jnp.maximum(z, 0.0)
    return z


if __name__ == "__main__":
    key = jax.random.PRNGKey(0)
    ks = jax.random.split(key, 8)

    B, N, T, F = 2, 16, 8, 32   # batch, num_nodes, temporal_dim (seq_len), feature_dim

    x = jax.random.normal(ks[0], (B, N, T, F), dtype=jnp.float32)

    # deterministic row-normalized adjacency (stands in for the precomputed graph kernel A_hat)
    adj_raw = jax.random.uniform(ks[1], (N, N), dtype=jnp.float32)
    adj = adj_raw / jnp.sum(adj_raw, axis=1, keepdims=True)

    # ODEFunc parameters (shapes from __init__, deterministically perturbed)
    alpha = 0.8 * jnp.ones((N,), jnp.float32) + 0.1 * jax.random.normal(ks[2], (N,), jnp.float32)
    w = jnp.eye(F, dtype=jnp.float32) + 0.05 * jax.random.normal(ks[3], (F, F), jnp.float32)
    d = jnp.ones((F,), jnp.float32) + 0.5 * jax.random.normal(ks[4], (F,), jnp.float32)
    w2 = jnp.eye(T, dtype=jnp.float32) + 0.05 * jax.random.normal(ks[5], (T, T), jnp.float32)
    d2 = jnp.ones((T,), jnp.float32) + 0.5 * jax.random.normal(ks[6], (T,), jnp.float32)

    x0 = x  # ODEG.forward: odeblock.set_x0(x)

    out = odeg_forward(x, x0, adj, alpha, w, d, w2, d2,
                       time=6.0, num_steps=1, fuse_relu=True)   # STGCNBlock uses time=6
    out = jax.block_until_ready(out)

    ref = odeg_reference(x, x0, adj, alpha, w, d, w2, d2,
                         time=6.0, num_steps=1, fuse_relu=True)
    assert out.shape == (B, N, T, F) and out.dtype == jnp.float32
    assert jnp.allclose(out, ref, atol=5e-3, rtol=5e-3), \
        f"max abs err = {jnp.max(jnp.abs(out - ref))}"

    print("KERNEL_OK")
</pallas_src>

<mosaic_0001>
module attributes {stable_mosaic.version = 11 : i64} {
  func.func @_odeg_euler_kernel(%arg0: memref<32x256xf32, #tpu.memory_space<vmem>>, %arg1: memref<32x256xf32, #tpu.memory_space<vmem>>, %arg2: memref<32x32xf32, #tpu.memory_space<vmem>>, %arg3: memref<256x256xf32, #tpu.memory_space<vmem>>, %arg4: memref<32x256xf32, #tpu.memory_space<vmem>>) attributes {dimension_semantics = [], scalar_prefetch = 0 : i64, scratch_operands = 0 : i64, tpu.core_type = #tpu.core_type<tc>} {
    %c0 = arith.constant 0 : index
    %c0_0 = arith.constant 0 : index
    %0 = vector.load %arg1[%c0, %c0_0] : memref<32x256xf32, #tpu.memory_space<vmem>>, vector<32x256xf32>
    %c0_1 = arith.constant 0 : index
    %c0_2 = arith.constant 0 : index
    %1 = vector.load %arg2[%c0_1, %c0_2] : memref<32x32xf32, #tpu.memory_space<vmem>>, vector<32x32xf32>
    %c0_3 = arith.constant 0 : index
    %c0_4 = arith.constant 0 : index
    %2 = vector.load %arg3[%c0_3, %c0_4] : memref<256x256xf32, #tpu.memory_space<vmem>>, vector<256x256xf32>
    %c0_5 = arith.constant 0 : index
    %c0_6 = arith.constant 0 : index
    %3 = vector.load %arg0[%c0_5, %c0_6] : memref<32x256xf32, #tpu.memory_space<vmem>>, vector<32x256xf32>
    %c0_i32 = arith.constant 0 : i32
    %cst = arith.constant dense<0.000000e+00> : vector<32x256xf32>
    %4 = tpu.matmul %1, %3, %cst {dimension_numbers = #tpu.dot_dimension_numbers<[1], [0], [0], [1], [0, 0, 1, 1], [], []>} : vector<32x32xf32>, vector<32x256xf32>, vector<32x256xf32> -> vector<32x256xf32>
    %cst_7 = arith.constant dense<0.000000e+00> : vector<32x256xf32>
    %5 = tpu.matmul %3, %2, %cst_7 {dimension_numbers = #tpu.dot_dimension_numbers<[1], [0], [0], [1], [0, 0, 1, 1], [], []>} : vector<32x256xf32>, vector<256x256xf32>, vector<32x256xf32> -> vector<32x256xf32>
    %6 = arith.addf %4, %5 : vector<32x256xf32>
    %7 = arith.addf %6, %0 : vector<32x256xf32>
    %cst_8 = arith.constant 6.000000e+00 : f32
    %8 = vector.broadcast %cst_8 : f32 to vector<32x256xf32>
    %9 = arith.mulf %8, %7 : vector<32x256xf32>
    %10 = arith.addf %3, %9 : vector<32x256xf32>
    %cst_9 = arith.constant 0.000000e+00 : f32
    %11 = vector.broadcast %cst_9 : f32 to vector<32x256xf32>
    %12 = arith.maximumf %10, %11 : vector<32x256xf32>
    %c0_10 = arith.constant 0 : index
    %c0_11 = arith.constant 0 : index
    %13 = vector.load %arg4[%c0_10, %c0_11] : memref<32x256xf32, #tpu.memory_space<vmem>>, vector<32x256xf32>
    tpu.vector_store %arg4[%c0_10, %c0_11], %12 {strides = array<i32>} : memref<32x256xf32, #tpu.memory_space<vmem>>, vector<32x256xf32>,
    return
  }
}

</mosaic_0001>

<llo_original>
// kernel: tpu_custom_call.1
$region0: #{tpu_custom_call.1}
  #allocation0 [shape = 'u32[]', space=smem, size = 0x4, offset = 0x4, fixed_abs, tag = 'smem constant byte address 0x4 - core index']
  #allocation1 [shape = 'u32[144,128]{1,0:T(1,128)}', space=vmem, size = 0x12000, scoped, tag = 'internal scratch']
  %s0 = inlined_call_operand.hbm [shape: f32[32,256], index: 0, kind: input, shape index: {}]
  %s1 = inlined_call_operand.hbm [shape: f32[32,256], index: 1, kind: input, shape index: {}]
  %s2 = inlined_call_operand.hbm [shape: f32[32,32], index: 2, kind: input, shape index: {}]
  %s3 = inlined_call_operand.hbm [shape: f32[256,256], index: 3, kind: input, shape index: {}]
  %s4 = inlined_call_operand.hbm [shape: f32[32,256], index: 4, kind: output, shape index: {}]
  %s5 = sld [smem:[#allocation0]]
  $region42: #{tpu_custom_call.1} parent=0
    _
  %s7 = ssub.s32 1, %s5
  %s8 = scalar_select 0, %s7, %s5
  $region1: #{tpu_custom_call.1} parent=0
    #allocation2 [shape = 'u8[32768]{0}', space=vmem, size = 0x8000, scoped, tag = 'input window, operand 0, single buffered']
    #allocation3 [shape = 's32[1]{0}', space=sflag, size = 0x4, scoped, tag = 'scoped memory for tpu_custom_call.1']
    #allocation4 [shape = 's32[1]{0}', space=sflag, size = 0x4, scoped, tag = 'scoped memory for tpu_custom_call.1']
    #allocation5 [shape = 'u8[32768]{0}', space=vmem, size = 0x8000, scoped, tag = 'input window, operand 1, single buffered']
    #allocation6 [shape = 's32[1]{0}', space=sflag, size = 0x4, scoped, tag = 'scoped memory for tpu_custom_call.1']
    #allocation7 [shape = 'u8[16384]{0}', space=vmem, size = 0x4000, scoped, tag = 'input window, operand 2, single buffered']
    #allocation8 [shape = 'u8[262144]{0}', space=vmem, size = 0x40000, scoped, tag = 'input window, operand 3, single buffered']
    #allocation9 [shape = 's32[1]{0}', space=sflag, size = 0x4, scoped, tag = 'scoped memory for tpu_custom_call.1']
    #allocation10 [shape = 'u8[32768]{0}', space=vmem, size = 0x8000, scoped, tag = 'output window, operand 0, single buffered']
    %9 = vsyncpa [#allocation3], 0
    %10 = vsyncpa [#allocation6], 0
    %11 = vsyncpa [#allocation9], 0
    %12 = vsyncpa [#allocation4], 0
    // Predicated region
    $region2: #{tpu_custom_call.1} parent=1 // pred_check
      _
    $region3: #{tpu_custom_call.1} parent=1 // pred_check_branch
      %14 = sbr.rel (0) target = $region5
    $region4: #{tpu_custom_call.1} parent=1 // pred_region
      %s16 = ssub.s32 1024, 1024
      %17 = vsyncadd [#allocation3], %s16
      %s18 = sshll.u32 [#allocation2], 4
      %s19 = int_to_ptr.vmem [resolvable:$true] %s18
      %24 = dma.hbm_to_vmem [thread:$0]  %s0, 1024, %s19, [#allocation3], 256, 256, 16
    $region5: #{tpu_custom_call.1} parent=1 // pred_fallthru
      _
    // Predicated region
    $region6: #{tpu_custom_call.1} parent=1 // pred_check
      _
    $region7: #{tpu_custom_call.1} parent=1 // pred_check_branch
      %26 = sbr.rel (0) target = $region9
    $region8: #{tpu_custom_call.1} parent=1 // pred_region
      %s28 = ssub.s32 1024, 1024
      %29 = vsyncadd [#allocation6], %s28
      %s30 = sshll.u32 [#allocation5], 4
      %s31 = int_to_ptr.vmem [resolvable:$true] %s30
      %36 = dma.hbm_to_vmem [thread:$0]  %s1, 1024, %s31, [#allocation6], 256, 256, 16
    $region9: #{tpu_custom_call.1} parent=1 // pred_fallthru
      _
    // Predicated region
    $region10: #{tpu_custom_call.1} parent=1 // pred_check
      _
    $region11: #{tpu_custom_call.1} parent=1 // pred_check_branch
      %38 = sbr.rel (0) target = $region13
    $region12: #{tpu_custom_call.1} parent=1 // pred_region
      %s40 = ssub.s32 512, 512
      %41 = vsyncadd [#allocation6], %s40
      %s42 = sshll.u32 [#allocation7], 4
      %s43 = int_to_ptr.vmem [resolvable:$true] %s42
      %48 = dma.hbm_to_vmem [thread:$0]  %s2, 512, %s43, [#allocation6], 128, 128, 8
    $region13: #{tpu_custom_call.1} parent=1 // pred_fallthru
      _
    // Predicated region
    $region14: #{tpu_custom_call.1} parent=1 // pred_check
      _
    $region15: #{tpu_custom_call.1} parent=1 // pred_check_branch
      %50 = sbr.rel (0) target = $region17
    $region16: #{tpu_custom_call.1} parent=1 // pred_region
      %s52 = ssub.s32 8192, 8192
      %53 = vsyncadd [#allocation9], %s52
      %s54 = sshll.u32 [#allocation8], 4
      %s55 = int_to_ptr.vmem [resolvable:$true] %s54
      %60 = dma.hbm_to_vmem [thread:$0]  %s3, 8192, %s55, [#allocation9], 256, 256, 16
    $region17: #{tpu_custom_call.1} parent=1 // pred_fallthru
      _
    // Predicated region
    $region18: #{tpu_custom_call.1} parent=1 // pred_check
      _
    $region19: #{tpu_custom_call.1} parent=1 // pred_check_branch
      %62 = sbr.rel (0) target = $region21
    $region20: #{tpu_custom_call.1} parent=1 // pred_region
      %63 = dma.done [#allocation3], 1024
    $region21: #{tpu_custom_call.1} parent=1 // pred_fallthru
      _
    // Predicated region
    $region22: #{tpu_custom_call.1} parent=1 // pred_check
      _
    $region23: #{tpu_custom_call.1} parent=1 // pred_check_branch
      %65 = sbr.rel (0) target = $region25
    $region24: #{tpu_custom_call.1} parent=1 // pred_region
      %66 = dma.done [#allocation6], 1024
    $region25: #{tpu_custom_call.1} parent=1 // pred_fallthru
      _
    // Predicated region
    $region26: #{tpu_custom_call.1} parent=1 // pred_check
      _
    $region27: #{tpu_custom_call.1} parent=1 // pred_check_branch
      %68 = sbr.rel (0) target = $region29
    $region28: #{tpu_custom_call.1} parent=1 // pred_region
      %69 = dma.done [#allocation6], 512
    $region29: #{tpu_custom_call.1} parent=1 // pred_fallthru
      _
    // Predicated region
    $region30: #{tpu_custom_call.1} parent=1 // pred_check
      _
    $region31: #{tpu_custom_call.1} parent=1 // pred_check_branch
      %71 = sbr.rel (0) target = $region33
    $region32: #{tpu_custom_call.1} parent=1 // pred_region
      %72 = dma.done [#allocation9], 8192
    $region33: #{tpu_custom_call.1} parent=1 // pred_fallthru
      _
    %v73 = vld [vmem:[#allocation5] sm:$0xff]
    %v74 = vld [vmem:[#allocation5 + $0x8] sm:$0xff]
    %v75 = vld [vmem:[#allocation5 + $0x10] sm:$0xff]
    %v76 = vld [vmem:[#allocation5 + $0x18] sm:$0xff]
    %v77 = vld [vmem:[#allocation5 + $0x20] sm:$0xff]
    %v78 = vld [vmem:[#allocation5 + $0x28] sm:$0xff]
    %v79 = vld [vmem:[#allocation5 + $0x30] sm:$0xff]
    %v80 = vld [vmem:[#allocation5 + $0x38] sm:$0xff]
    %v81 = vld [vmem:[#allocation7] sm:$0xff]
    %v82 = vld [vmem:[#allocation7 + $0x8] sm:$0xff]
    %v83 = vld [vmem:[#allocation7 + $0x10] sm:$0xff]
    %v84 = vld [vmem:[#allocation7 + $0x18] sm:$0xff]
    %v85 = vld [vmem:[#allocation8] sm:$0xff]
    %v86 = vld [vmem:[#allocation8 + $0x8] sm:$0xff]
    %v87 = vld [vmem:[#allocation8 + $0x10] sm:$0xff]
    %v88 = vld [vmem:[#allocation8 + $0x18] sm:$0xff]
    %v89 = vld [vmem:[#allocation8 + $0x20] sm:$0xff]
    %v90 = vld [vmem:[#allocation8 + $0x28] sm:$0xff]
    %v91 = vld [vmem:[#allocation8 + $0x30] sm:$0xff]
    %v92 = vld [vmem:[#allocation8 + $0x38] sm:$0xff]
    %v93 = vld [vmem:[#allocation8 + $0x40] sm:$0xff]
    %v94 = vld [vmem:[#allocation8 + $0x48] sm:$0xff]
    %v95 = vld [vmem:[#allocation8 + $0x50] sm:$0xff]
    %v96 = vld [vmem:[#allocation8 + $0x58] sm:$0xff]
    %v97 = vld [vmem:[#allocation8 + $0x60] sm:$0xff]
    %v98 = vld [vmem:[#allocation8 + $0x68] sm:$0xff]
    %v99 = vld [vmem:[#allocation8 + $0x70] sm:$0xff]
    %v100 = vld [vmem:[#allocation8 + $0x78] sm:$0xff]
    %v101 = vld [vmem:[#allocation8 + $0x80] sm:$0xff]
    %v102 = vld [vmem:[#allocation8 + $0x88] sm:$0xff]
    %v103 = vld [vmem:[#allocation8 + $0x90] sm:$0xff]
    %v104 = vld [vmem:[#allocation8 + $0x98] sm:$0xff]
    %v105 = vld [vmem:[#allocation8 + $0xa0] sm:$0xff]
    %v106 = vld [vmem:[#allocation8 + $0xa8] sm:$0xff]
    %v107 = vld [vmem:[#allocation8 + $0xb0] sm:$0xff]
    %v108 = vld [vmem:[#allocation8 + $0xb8] sm:$0xff]
    %v109 = vld [vmem:[#allocation8 + $0xc0] sm:$0xff]
    %v110 = vld [vmem:[#allocation8 + $0xc8] sm:$0xff]
    %v111 = vld [vmem:[#allocation8 + $0xd0] sm:$0xff]
    %v112 = vld [vmem:[#allocation8 + $0xd8] sm:$0xff]
    %v113 = vld [vmem:[#allocation8 + $0xe0] sm:$0xff]
    %v114 = vld [vmem:[#allocation8 + $0xe8] sm:$0xff]
    %v115 = vld [vmem:[#allocation8 + $0xf0] sm:$0xff]
    %v116 = vld [vmem:[#allocation8 + $0xf8] sm:$0xff]
    %v117 = vld [vmem:[#allocation8 + $0x100] sm:$0xff]
    %v118 = vld [vmem:[#allocation8 + $0x108] sm:$0xff]
    %v119 = vld [vmem:[#allocation8 + $0x110] sm:$0xff]
    %v120 = vld [vmem:[#allocation8 + $0x118] sm:$0xff]
    %v121 = vld [vmem:[#allocation8 + $0x120] sm:$0xff]
    %v122 = vld [vmem:[#allocation8 + $0x128] sm:$0xff]
    %v123 = vld [vmem:[#allocation8 + $0x130] sm:$0xff]
    %v124 = vld [vmem:[#allocation8 + $0x138] sm:$0xff]
    %v125 = vld [vmem:[#allocation8 + $0x140] sm:$0xff]
    %v126 = vld [vmem:[#allocation8 + $0x148] sm:$0xff]
    %v127 = vld [vmem:[#allocation8 + $0x150] sm:$0xff]
    %v128 = vld [vmem:[#allocation8 + $0x158] sm:$0xff]
    %v129 = vld [vmem:[#allocation8 + $0x160] sm:$0xff]
    %v130 = vld [vmem:[#allocation8 + $0x168] sm:$0xff]
    %v131 = vld [vmem:[#allocation8 + $0x170] sm:$0xff]
    %v132 = vld [vmem:[#allocation8 + $0x178] sm:$0xff]
    %v133 = vld [vmem:[#allocation8 + $0x180] sm:$0xff]
    %v134 = vld [vmem:[#allocation8 + $0x188] sm:$0xff]
    %v135 = vld [vmem:[#allocation8 + $0x190] sm:$0xff]
    %v136 = vld [vmem:[#allocation8 + $0x198] sm:$0xff]
    %v137 = vld [vmem:[#allocation8 + $0x1a0] sm:$0xff]
    %v138 = vld [vmem:[#allocation8 + $0x1a8] sm:$0xff]
    %v139 = vld [vmem:[#allocation8 + $0x1b0] sm:$0xff]
    %v140 = vld [vmem:[#allocation8 + $0x1b8] sm:$0xff]
    %v141 = vld [vmem:[#allocation8 + $0x1c0] sm:$0xff]
    %v142 = vld [vmem:[#allocation8 + $0x1c8] sm:$0xff]
    %v143 = vld [vmem:[#allocation8 + $0x1d0] sm:$0xff]
    %v144 = vld [vmem:[#allocation8 + $0x1d8] sm:$0xff]
    %v145 = vld [vmem:[#allocation8 + $0x1e0] sm:$0xff]
    %v146 = vld [vmem:[#allocation8 + $0x1e8] sm:$0xff]
    %v147 = vld [vmem:[#allocation8 + $0x1f0] sm:$0xff]
    %v148 = vld [vmem:[#allocation8 + $0x1f8] sm:$0xff]
    %v149 = vld [vmem:[#allocation2] sm:$0xff]
    %v150 = vld [vmem:[#allocation2 + $0x8] sm:$0xff]
    %v151 = vld [vmem:[#allocation2 + $0x10] sm:$0xff]
    %v152 = vld [vmem:[#allocation2 + $0x18] sm:$0xff]
    %v153 = vld [vmem:[#allocation2 + $0x20] sm:$0xff]
    %v154 = vld [vmem:[#allocation2 + $0x28] sm:$0xff]
    %v155 = vld [vmem:[#allocation2 + $0x30] sm:$0xff]
    %v156 = vld [vmem:[#allocation2 + $0x38] sm:$0xff]
    %157 = vmatprep.subr.mxu0 %v86
    %158 = vmatpush1.msra.mxu0 %v85
    %159 = vmatprep.subr.mxu0 %v88
    %160 = vmatpush1.msra.mxu0 %v87
    %161 = vmatprep.subr.mxu0 %v90
    %162 = vmatpush1.msra.mxu0 %v89
    %163 = vmatprep.subr.mxu0 %v92
    %164 = vmatpush1.msra.mxu0 %v91
    %165 = vmatprep.subr.mxu0 %v94
    %166 = vmatpush1.msra.mxu0 %v93
    %167 = vmatprep.subr.mxu0 %v96
    %168 = vmatpush1.msra.mxu0 %v95
    %169 = vmatprep.subr.mxu0 %v98
    %170 = vmatpush1.msra.mxu0 %v97
    %171 = vmatprep.subr.mxu0 %v100
    %172 = vmatpush1.msra.mxu0 %v99
    %173 = vmatprep.subr.mxu0 %v102
    %174 = vmatpush1.msra.mxu0 %v101
    %175 = vmatprep.subr.mxu0 %v104
    %176 = vmatpush1.msra.mxu0 %v103
    %177 = vmatprep.subr.mxu0 %v106
    %178 = vmatpush1.msra.mxu0 %v105
    %179 = vmatprep.subr.mxu0 %v108
    %180 = vmatpush1.msra.mxu0 %v107
    %181 = vmatprep.subr.mxu0 %v110
    %182 = vmatpush1.msra.mxu0 %v109
    %183 = vmatprep.subr.mxu0 %v112
    %184 = vmatpush1.msra.mxu0 %v111
    %185 = vmatprep.subr.mxu0 %v114
    %186 = vmatpush1.msra.mxu0 %v113
    %187 = vmatprep.subr.mxu0 %v116
    %188 = vmatpush1.msra.mxu0 %v115
    %189 = vmatprep.subr.mxu0 %v118
    %190 = vmatpush1.msra.mxu0 %v117
    %191 = vmatprep.subr.mxu0 %v120
    %192 = vmatpush1.msra.mxu0 %v119
    %193 = vmatprep.subr.mxu0 %v122
    %194 = vmatpush1.msra.mxu0 %v121
    %195 = vmatprep.subr.mxu0 %v124
    %196 = vmatpush1.msra.mxu0 %v123
    %197 = vmatprep.subr.mxu0 %v126
    %198 = vmatpush1.msra.mxu0 %v125
    %199 = vmatprep.subr.mxu0 %v128
    %200 = vmatpush1.msra.mxu0 %v127
    %201 = vmatprep.subr.mxu0 %v130
    %202 = vmatpush1.msra.mxu0 %v129
    %203 = vmatprep.subr.mxu0 %v132
    %204 = vmatpush1.msra.mxu0 %v131
    %205 = vmatprep.subr.mxu0 %v134
    %206 = vmatpush1.msra.mxu0 %v133
    %207 = vmatprep.subr.mxu0 %v136
    %208 = vmatpush1.msra.mxu0 %v135
    %209 = vmatprep.subr.mxu0 %v138
    %210 = vmatpush1.msra.mxu0 %v137
    %211 = vmatprep.subr.mxu0 %v140
    %212 = vmatpush1.msra.mxu0 %v139
    %213 = vmatprep.subr.mxu0 %v142
    %214 = vmatpush1.msra.mxu0 %v141
    %215 = vmatprep.subr.mxu0 %v144
    %216 = vmatpush1.msra.mxu0 %v143
    %217 = vmatprep.subr.mxu0 %v146
    %218 = vmatpush1.msra.mxu0 %v145
    %219 = vmatprep.subr.mxu0 %v148
    %220 = vmatpush1.msra.mxu0 %v147
    %221 = vmatprep.mubr.f32.mxu0 %v150
    %222 = vmatmul.mubr.f32.gmra.mrb[0].mxu0 %v149
    %v223 = vpop.f32.mrb[0].mxu0
    %v224 = vadd.f32 0.0, %v223
    %v225 = vpop.f32.mrb[0].mxu0
    %v226 = vadd.f32 0.0, %v225
    %227 = vmatprep.mubr.f32.mxu0 %v152
    %228 = vmatmul.mubr.f32.gmra.mrb[0].mxu0 %v151
    %v229 = vpop.f32.mrb[0].mxu0
    %v230 = vadd.f32 0.0, %v229
    %v231 = vpop.f32.mrb[0].mxu0
    %v232 = vadd.f32 0.0, %v231
    %233 = vmatprep.mubr.f32.mxu0 %v154
    %234 = vmatmul.mubr.f32.gmra.mrb[0].mxu0 %v153
    %v235 = vpop.f32.mrb[0].mxu0
    %v236 = vadd.f32 0.0, %v235
    %v237 = vpop.f32.mrb[0].mxu0
    %v238 = vadd.f32 0.0, %v237
    %239 = vmatprep.mubr.f32.mxu0 %v156
    %240 = vmatmul.mubr.f32.gmra.mrb[0].mxu0 %v155
    %v241 = vpop.f32.mrb[0].mxu0
    %v242 = vadd.f32 0.0, %v241
    %v243 = vpop.f32.mrb[0].mxu0
    %v244 = vadd.f32 0.0, %v243
    %245 = vdwg.mxu0
    %vm246 = vcmask 261120
    %v248 = vsel %vm246, %v81, 0
    %v251 = vsel %vm246, %v82, 0
    %v254 = vsel %vm246, %v83, 0
    %v257 = vsel %vm246, %v84, 0
    %259 = vmatprep.subr.mxu0 %v150
    %260 = vmatpush1.msra.mxu0 %v149
    %261 = vmatprep.subr.mxu0 %v152
    %262 = vmatpush1.msra.mxu0 %v151
    %263 = vmatprep.subr.mxu0 %v154
    %264 = vmatpush1.msra.mxu0 %v153
    %265 = vmatprep.subr.mxu0 %v156
    %266 = vmatpush1.msra.mxu0 %v155
    %267 = vmatprep.subr.mxu0 0.0
    %268 = vmatpush1.msra.mxu0 0.0
    %269 = vmatprep.subr.mxu0 0.0
    %270 = vmatpush1.msra.mxu0 0.0
    %271 = vmatprep.subr.mxu0 0.0
    %272 = vmatpush1.msra.mxu0 0.0
    %273 = vmatprep.subr.mxu0 0.0
    %274 = vmatpush1.msra.mxu0 0.0
    %275 = vmatprep.subr.mxu0 0.0
    %276 = vmatpush1.msra.mxu0 0.0
    %277 = vmatprep.subr.mxu0 0.0
    %278 = vmatpush1.msra.mxu0 0.0
    %279 = vmatprep.subr.mxu0 0.0
    %280 = vmatpush1.msra.mxu0 0.0
    %281 = vmatprep.subr.mxu0 0.0
    %282 = vmatpush1.msra.mxu0 0.0
    %283 = vmatprep.subr.mxu0 0.0
    %284 = vmatpush1.msra.mxu0 0.0
    %285 = vmatprep.subr.mxu0 0.0
    %286 = vmatpush1.msra.mxu0 0.0
    %287 = vmatprep.subr.mxu0 0.0
    %288 = vmatpush1.msra.mxu0 0.0
    %289 = vmatprep.subr.mxu0 0.0
    %290 = vmatpush1.msra.mxu0 0.0
    %291 = vmatprep.subr.mxu0 0.0
    %292 = vmatpush1.msra.mxu0 0.0
    %293 = vmatprep.subr.mxu0 0.0
    %294 = vmatpush1.msra.mxu0 0.0
    %295 = vmatprep.subr.mxu0 0.0
    %296 = vmatpush1.msra.mxu0 0.0
    %297 = vmatprep.subr.mxu0 0.0
    %298 = vmatpush1.msra.mxu0 0.0
    %299 = vmatprep.subr.mxu0 0.0
    %300 = vmatpush1.msra.mxu0 0.0
    %301 = vmatprep.subr.mxu0 0.0
    %302 = vmatpush1.msra.mxu0 0.0
    %303 = vmatprep.subr.mxu0 0.0
    %304 = vmatpush1.msra.mxu0 0.0
    %305 = vmatprep.subr.mxu0 0.0
    %306 = vmatpush1.msra.mxu0 0.0
    %307 = vmatprep.subr.mxu0 0.0
    %308 = vmatpush1.msra.mxu0 0.0
    %309 = vmatprep.subr.mxu0 0.0
    %310 = vmatpush1.msra.mxu0 0.0
    %311 = vmatprep.subr.mxu0 0.0
    %312 = vmatpush1.msra.mxu0 0.0
    %313 = vmatprep.subr.mxu0 0.0
    %314 = vmatpush1.msra.mxu0 0.0
    %315 = vmatprep.subr.mxu0 0.0
    %316 = vmatpush1.msra.mxu0 0.0
    %317 = vmatprep.subr.mxu0 0.0
    %318 = vmatpush1.msra.mxu0 0.0
    %319 = vmatprep.subr.mxu0 0.0
    %320 = vmatpush1.msra.mxu0 0.0
    %321 = vmatprep.subr.mxu0 0.0
    %322 = vmatpush1.msra.mxu0 0.0
    %323 = vmatprep.mubr.f32.mxu0 0.0
    %324 = vmatmul.mubr.f32.gmra.mrb[0].mxu0 %v248
    %v325 = vpop.f32.mrb[0].mxu0
    %v326 = vadd.f32 %v224, %v325
    %v327 = vpop.f32.mrb[0].mxu0
    %v328 = vadd.f32 %v226, %v327
    %329 = vmatprep.mubr.f32.mxu0 0.0
    %330 = vmatmul.mubr.f32.gmra.mrb[0].mxu0 %v251
    %v331 = vpop.f32.mrb[0].mxu0
    %v332 = vadd.f32 %v230, %v331
    %v333 = vpop.f32.mrb[0].mxu0
    %v334 = vadd.f32 %v232, %v333
    %335 = vmatprep.mubr.f32.mxu0 0.0
    %336 = vmatmul.mubr.f32.gmra.mrb[0].mxu0 %v254
    %v337 = vpop.f32.mrb[0].mxu0
    %v338 = vadd.f32 %v236, %v337
    %v339 = vpop.f32.mrb[0].mxu0
    %v340 = vadd.f32 %v238, %v339
    %341 = vmatprep.mubr.f32.mxu0 0.0
    %342 = vmatmul.mubr.f32.gmra.mrb[0].mxu0 %v257
    %v343 = vpop.f32.mrb[0].mxu0
    %v344 = vadd.f32 %v242, %v343
    %v345 = vpop.f32.mrb[0].mxu0
    %v346 = vadd.f32 %v244, %v345
    %347 = vdwg.mxu0
    %v348 = vadd.f32 %v326, %v73
    %v349 = vadd.f32 %v328, %v74
    %v350 = vadd.f32 %v332, %v75
    %v351 = vadd.f32 %v334, %v76
    %v352 = vadd.f32 %v338, %v77
    %v353 = vadd.f32 %v340, %v78
    %v354 = vadd.f32 %v344, %v79
    %v355 = vadd.f32 %v346, %v80
    %v356 = vmul.f32 %v348, 6.0
    %v357 = vmul.f32 %v349, 6.0
    %v358 = vmul.f32 %v350, 6.0
    %v359 = vmul.f32 %v351, 6.0
    %v360 = vmul.f32 %v352, 6.0
    %v361 = vmul.f32 %v353, 6.0
    %v362 = vmul.f32 %v354, 6.0
    %v363 = vmul.f32 %v355, 6.0
    %v364 = vadd.f32 %v149, %v356
    %v365 = vadd.f32 %v150, %v357
    %v366 = vadd.f32 %v151, %v358
    %v367 = vadd.f32 %v152, %v359
    %v368 = vadd.f32 %v153, %v360
    %v369 = vadd.f32 %v154, %v361
    %v370 = vadd.f32 %v155, %v362
    %v371 = vadd.f32 %v156, %v363
    %v372 = vmax.f32 %v364, 0.0
    %v373 = vmax.f32 %v365, 0.0
    %v374 = vmax.f32 %v366, 0.0
    %v375 = vmax.f32 %v367, 0.0
    %v376 = vmax.f32 %v368, 0.0
    %v377 = vmax.f32 %v369, 0.0
    %v378 = vmax.f32 %v370, 0.0
    %v379 = vmax.f32 %v371, 0.0
    %380 = vst [vmem:[#allocation10] sm:$0xff] %v372
    %381 = vst [vmem:[#allocation10 + $0x8] sm:$0xff] %v373
    %382 = vst [vmem:[#allocation10 + $0x10] sm:$0xff] %v374
    %383 = vst [vmem:[#allocation10 + $0x18] sm:$0xff] %v375
    %384 = vst [vmem:[#allocation10 + $0x20] sm:$0xff] %v376
    %385 = vst [vmem:[#allocation10 + $0x28] sm:$0xff] %v377
    %386 = vst [vmem:[#allocation10 + $0x30] sm:$0xff] %v378
    %387 = vst [vmem:[#allocation10 + $0x38] sm:$0xff] %v379
    // Predicated region
    $region34: #{tpu_custom_call.1} parent=1 // pred_check
      _
    $region35: #{tpu_custom_call.1} parent=1 // pred_check_branch
      %389 = sbr.rel (0) target = $region37
    $region36: #{tpu_custom_call.1} parent=1 // pred_region
      %s391 = ssub.s32 1024, 1024
      %392 = vsyncadd [#allocation4], %s391
      %s393 = sshll.u32 [#allocation10], 4
      %s394 = int_to_ptr.vmem [resolvable:$true] %s393
      %399 = dma.vmem_to_hbm [thread:$0]  %s394, 1024, %s4, [#allocation4], 256, 256, 16
    $region37: #{tpu_custom_call.1} parent=1 // pred_fallthru
      _
    // Predicated region
    $region38: #{tpu_custom_call.1} parent=1 // pred_check
      _
    $region39: #{tpu_custom_call.1} parent=1 // pred_check_branch
      %401 = sbr.rel (0) target = $region41
    $region40: #{tpu_custom_call.1} parent=1 // pred_region
      %402 = dma.done [#allocation4], 1024
    $region41: #{tpu_custom_call.1} parent=1 // pred_fallthru
      _
    %403 = vsyncpa [#allocation3], 1
    %404 = vsyncpa [#allocation6], 1
    %405 = vsyncpa [#allocation9], 1
    %406 = vsyncpa [#allocation4], 1

</llo_original>
